<compile_context>
chip_gen: v5e
topology: v5e:2x2
jax: 0.10.0
libtpu: 0.0.40
codegen_flags: <defaults>
</compile_context>

<pallas_src>
import functools

import jax
import jax.numpy as jnp
from jax.experimental import pallas as pl
from jax.experimental.pallas import tpu as pltpu


def _round_up(x, m):
    return ((x + m - 1) // m) * m


def _lstm_refine_kernel(hidden_dim,
                        ctrl_ref, veh_ref, state_ref,
                        w1_ref, b1_ref, w2_ref, b2_ref,
                        w_out_ref, b_out_ref,
                        out_ref, states_ref):
    """Single-timestep 2-layer LSTM + output projection.

    ctrl_ref   : (TR, Dc)        control-input rows
    veh_ref    : (TR, Dv)        vehicle-state rows
    state_ref  : (TR, 4H)        packed previous state [h1 | c1 | h2 | c2]
    w1/b1      : (Dc+Dv+H, 4H), (1, 4H)   fused layer-1 [W_ih ; W_hh], b_ih+b_hh
    w2/b2      : (2H, 4H), (1, 4H)        fused layer-2 [W_ih ; W_hh], b_ih+b_hh
    w_out/b_out: (H, OUT_PAD), (1, OUT_PAD)  output layer (lane-padded)
    out_ref    : (TR, OUT_PAD)   refined control (lane-dense; sliced outside)
    states_ref : (TR, 4H)        new packed state [h1 | c1 | h2 | c2]
    """
    H = hidden_dim
    state = state_ref[...]
    h1p = state[:, 0 * H:1 * H]
    c1p = state[:, 1 * H:2 * H]
    h2p = state[:, 2 * H:3 * H]
    c2p = state[:, 3 * H:4 * H]

    def lstm_cell(gates, c_prev):
        i_g = jax.nn.sigmoid(gates[:, 0 * H:1 * H])
        f_g = jax.nn.sigmoid(gates[:, 1 * H:2 * H])
        g_g = jnp.tanh(gates[:, 2 * H:3 * H])
        o_g = jax.nn.sigmoid(gates[:, 3 * H:4 * H])
        c_new = f_g * c_prev + i_g * g_g
        h_new = o_g * jnp.tanh(c_new)
        return h_new, c_new

    # Layer 1: one fused matmul over [control | vehicle_state | h1_prev].
    xh1 = jnp.concatenate([ctrl_ref[...], veh_ref[...], h1p], axis=-1)
    gates1 = jnp.dot(xh1, w1_ref[...],
                     preferred_element_type=jnp.float32) + b1_ref[...]
    h1, c1 = lstm_cell(gates1, c1p)

    # Layer 2: one fused matmul over [h1 | h2_prev].
    xh2 = jnp.concatenate([h1, h2p], axis=-1)
    gates2 = jnp.dot(xh2, w2_ref[...],
                     preferred_element_type=jnp.float32) + b2_ref[...]
    h2, c2 = lstm_cell(gates2, c2p)

    # Output projection (lane-padded weights -> unmasked 128-lane stores).
    out_ref[...] = (jnp.dot(h2, w_out_ref[...],
                            preferred_element_type=jnp.float32)
                    + b_out_ref[...])
    # New state in the same packed layout as the input slab.
    states_ref[...] = jnp.concatenate([h1, c1, h2, c2], axis=-1)


def control_refinement_lstm(control_input, vehicle_state, params,
                            packed_state=None, *, max_row_tile=512):
    """Returns (refined_control, new_packed_state).

    packed_state: (B, 4H) slab [h1 | c1 | h2 | c2] from a previous call, or
    None for zero initialisation (as in the PyTorch module).  Feed the
    returned slab straight back in on the next control-loop step.
    """
    f32 = jnp.float32
    B, Dc = control_input.shape
    Dv = vehicle_state.shape[1]
    H = params["w2"].shape[0] // 2
    out_dim = params["out_dim"]
    OUT_PAD = params["w_out"].shape[1]

    ctrl = control_input if control_input.dtype == f32 else control_input.astype(f32)
    veh = vehicle_state if vehicle_state.dtype == f32 else vehicle_state.astype(f32)
    if packed_state is None:
        packed_state = jnp.zeros((B, 4 * H), f32)
    elif packed_state.dtype != f32:
        packed_state = packed_state.astype(f32)

    # Row tiling: one 8-row tile for tiny batches; otherwise cap the tile so
    # the parallel grid has >= 2 steps (fills both TensorCores on v7x).
    if B <= 8:
        row_tile = 8
    else:
        row_tile = min(max_row_tile, _round_up((B + 1) // 2, 8))
    R_pad = _round_up(B, row_tile)
    padded = R_pad != B
    if padded:
        pad = lambda a: jnp.pad(a, ((0, R_pad - B), (0, 0)))
        ctrl, veh, packed_state = pad(ctrl), pad(veh), pad(packed_state)

    grid = (R_pad // row_tile,)
    kernel = functools.partial(_lstm_refine_kernel, H)

    def row_spec(width):
        return pl.BlockSpec((row_tile, width), lambda r: (r, 0))

    def full(shape):
        return pl.BlockSpec(shape, lambda r: tuple(0 for _ in shape))

    D = Dc + Dv
    # Advisory cost estimate for the XLA scheduler.
    flops = 2 * R_pad * ((D + H) * 4 * H + 2 * H * 4 * H + H * OUT_PAD)
    transcendentals = R_pad * 10 * H
    bytes_accessed = 4 * (
        R_pad * (D + 4 * H)                                   # row inputs + state
        + (D + H) * 4 * H + 2 * H * 4 * H + 2 * 4 * H         # fused gate weights
        + H * OUT_PAD + OUT_PAD                               # output layer
        + R_pad * (OUT_PAD + 4 * H))                          # outputs

    refined_p, states_p = pl.pallas_call(
        kernel,
        out_shape=(
            jax.ShapeDtypeStruct((R_pad, OUT_PAD), f32),
            jax.ShapeDtypeStruct((R_pad, 4 * H), f32),
        ),
        grid_spec=pltpu.PrefetchScalarGridSpec(
            num_scalar_prefetch=0,
            grid=grid,
            in_specs=[
                row_spec(Dc), row_spec(Dv), row_spec(4 * H),   # rows + state slab
                full((D + H, 4 * H)), full((1, 4 * H)),        # fused layer 1
                full((2 * H, 4 * H)), full((1, 4 * H)),        # fused layer 2
                full((H, OUT_PAD)), full((1, OUT_PAD)),        # output layer
            ],
            out_specs=[
                row_spec(OUT_PAD),
                row_spec(4 * H),
            ],
        ),
        compiler_params=pltpu.CompilerParams(
            dimension_semantics=("parallel",),
            vmem_limit_bytes=32 * 1024 * 1024),
        cost_estimate=pl.CostEstimate(
            flops=int(flops),
            transcendentals=int(transcendentals),
            bytes_accessed=int(bytes_accessed)),
    )(
        ctrl, veh, packed_state,
        params["w1"], params["b1"],
        params["w2"], params["b2"],
        params["w_out"], params["b_out"],
    )

    refined = refined_p[:B, :out_dim] if (padded or OUT_PAD != out_dim) else refined_p
    new_state = states_p[:B] if padded else states_p
    return refined, new_state


def unpack_state(packed_state, hidden_dim):
    """(B, 4H) slab -> ((2, B, H) hidden, (2, B, H) cell), PyTorch layout."""
    H = hidden_dim
    h = jnp.stack([packed_state[:, 0 * H:1 * H], packed_state[:, 2 * H:3 * H]], 0)
    c = jnp.stack([packed_state[:, 1 * H:2 * H], packed_state[:, 3 * H:4 * H]], 0)
    return h, c


def pack_state(hidden_state, cell_state):
    """((2, B, H), (2, B, H)) -> (B, 4H) packed slab."""
    return jnp.concatenate(
        [hidden_state[0], cell_state[0], hidden_state[1], cell_state[1]], axis=-1)


def init_params(key, control_dim, state_dim, hidden_dim, output_dim):
    """Deterministic init in the kernel's fused layout.

    From a PyTorch nn.LSTM checkpoint the mapping is:
      w1 = concat([weight_ih_l0.T, weight_hh_l0.T], axis=0)   # (D+H, 4H), i|f|g|o
      b1 = (bias_ih_l0 + bias_hh_l0)[None, :]
      w2 = concat([weight_ih_l1.T, weight_hh_l1.T], axis=0)   # (2H, 4H)
      b2 = (bias_ih_l1 + bias_hh_l1)[None, :]
      w_out = output_layer.weight.T lane-padded to a multiple of 128
    """
    D = control_dim + state_dim
    H = hidden_dim
    OUT_PAD = _round_up(output_dim, 128)
    ks = jax.random.split(key, 8)
    s = 0.1
    w_out = s * jax.random.normal(ks[6], (H, output_dim), jnp.float32)
    b_out = s * jax.random.normal(ks[7], (1, output_dim), jnp.float32)
    return {
        "w1": s * jax.random.normal(ks[0], (D + H, 4 * H), jnp.float32),
        "b1": s * jax.random.normal(ks[1], (1, 4 * H), jnp.float32),
        "w2": s * jax.random.normal(ks[2], (2 * H, 4 * H), jnp.float32),
        "b2": s * jax.random.normal(ks[3], (1, 4 * H), jnp.float32),
        "w_out": jnp.pad(w_out, ((0, 0), (0, OUT_PAD - output_dim))),
        "b_out": jnp.pad(b_out, ((0, 0), (0, OUT_PAD - output_dim))),
        "out_dim": output_dim,
    }


def reference(control_input, vehicle_state, params, packed_state=None):
    """Pure-JAX reference mirroring the PyTorch forward (seq_len == 1)."""
    hi = jax.lax.Precision.HIGHEST
    H = params["w2"].shape[0] // 2
    out_dim = params["out_dim"]
    x = jnp.concatenate([control_input, vehicle_state], axis=1).astype(jnp.float32)
    B = x.shape[0]
    if packed_state is None:
        packed_state = jnp.zeros((B, 4 * H), jnp.float32)
    h1p = packed_state[:, 0 * H:1 * H]
    c1p = packed_state[:, 1 * H:2 * H]
    h2p = packed_state[:, 2 * H:3 * H]
    c2p = packed_state[:, 3 * H:4 * H]

    def cell(inp, h, c, w, b):
        gates = jnp.dot(jnp.concatenate([inp, h], axis=-1), w, precision=hi) + b
        i_g = jax.nn.sigmoid(gates[:, 0 * H:1 * H])
        f_g = jax.nn.sigmoid(gates[:, 1 * H:2 * H])
        g_g = jnp.tanh(gates[:, 2 * H:3 * H])
        o_g = jax.nn.sigmoid(gates[:, 3 * H:4 * H])
        c_new = f_g * c + i_g * g_g
        h_new = o_g * jnp.tanh(c_new)
        return h_new, c_new

    h1, c1 = cell(x, h1p, c1p, params["w1"], params["b1"])
    h2, c2 = cell(h1, h2p, c2p, params["w2"], params["b2"])
    refined = (jnp.dot(h2, params["w_out"][:, :out_dim], precision=hi)
               + params["b_out"][:, :out_dim])
    new_state = jnp.concatenate([h1, c1, h2, c2], axis=-1)
    return refined, new_state


if __name__ == "__main__":
    batch = 2
    control_dim = 4
    state_dim = 12
    hidden_dim = 32
    output_dim = 4

    key = jax.random.PRNGKey(0)
    k_c1, k_s1, k_c2, k_s2, k_cb, k_sb, k_params = jax.random.split(key, 7)
    control_input = jax.random.normal(k_c1, (batch, control_dim), jnp.float32)
    vehicle_state = jax.random.normal(k_s1, (batch, state_dim), jnp.float32)
    params = init_params(k_params, control_dim, state_dim, hidden_dim, output_dim)

    # First call: state is None -> zero-init (as in the PyTorch module).
    refined, state = control_refinement_lstm(control_input, vehicle_state, params)
    refined = jax.block_until_ready(refined)

    refined_ref, state_ref = reference(control_input, vehicle_state, params)
    assert refined.shape == (batch, output_dim)
    assert state.shape == (batch, 4 * hidden_dim)
    assert jnp.allclose(refined, refined_ref, atol=1e-5, rtol=1e-5)
    assert jnp.allclose(state, state_ref, atol=1e-5, rtol=1e-5)
    # Unpacked layout matches the PyTorch (2, B, H) convention.
    h_new, c_new = unpack_state(state, hidden_dim)
    assert h_new.shape == (2, batch, hidden_dim)
    assert c_new.shape == (2, batch, hidden_dim)

    # Second call: carry the recurrent state slab straight back in.
    control_input2 = jax.random.normal(k_c2, (batch, control_dim), jnp.float32)
    vehicle_state2 = jax.random.normal(k_s2, (batch, state_dim), jnp.float32)
    refined2, state2 = control_refinement_lstm(
        control_input2, vehicle_state2, params, state)
    refined2 = jax.block_until_ready(refined2)

    refined2_ref, state2_ref = reference(
        control_input2, vehicle_state2, params, state_ref)
    assert jnp.allclose(refined2, refined2_ref, atol=1e-5, rtol=1e-5)
    assert jnp.allclose(state2, state2_ref, atol=1e-5, rtol=1e-5)

    # Larger, non-multiple-of-8 batch: exercises row padding and a 2-step
    # parallel grid (megacore path on v7x).
    big_batch = 20
    control_b = jax.random.normal(k_cb, (big_batch, control_dim), jnp.float32)
    vehicle_b = jax.random.normal(k_sb, (big_batch, state_dim), jnp.float32)
    refined_b, state_b = control_refinement_lstm(control_b, vehicle_b, params)
    refined_b = jax.block_until_ready(refined_b)
    refined_b_ref, state_b_ref = reference(control_b, vehicle_b, params)
    assert jnp.allclose(refined_b, refined_b_ref, atol=1e-5, rtol=1e-5)
    assert jnp.allclose(state_b, state_b_ref, atol=1e-5, rtol=1e-5)

    print("KERNEL_OK")
</pallas_src>

<mosaic_0001>
module attributes {stable_mosaic.version = 11 : i64} {
  func.func @_lstm_refine_kernel(%arg0: i32, %arg1: memref<8x4xf32, #tpu.memory_space<vmem>>, %arg2: memref<8x12xf32, #tpu.memory_space<vmem>>, %arg3: memref<8x128xf32, #tpu.memory_space<vmem>>, %arg4: memref<48x128xf32, #tpu.memory_space<vmem>>, %arg5: memref<1x128xf32, #tpu.memory_space<vmem>>, %arg6: memref<64x128xf32, #tpu.memory_space<vmem>>, %arg7: memref<1x128xf32, #tpu.memory_space<vmem>>, %arg8: memref<32x128xf32, #tpu.memory_space<vmem>>, %arg9: memref<1x128xf32, #tpu.memory_space<vmem>>, %arg10: memref<8x128xf32, #tpu.memory_space<vmem>>, %arg11: memref<8x128xf32, #tpu.memory_space<vmem>>) attributes {dimension_semantics = [#tpu.dimension_semantics<parallel>], iteration_bounds = array<i64: 1>, scalar_prefetch = 0 : i64, scratch_operands = 0 : i64, tpu.core_type = #tpu.core_type<tc>, window_params = [{transform_indices = @transform_0, window_bounds = array<i64: 8, 4>}, {transform_indices = @transform_1, window_bounds = array<i64: 8, 12>}, {transform_indices = @transform_2, window_bounds = array<i64: 8, 128>}, {pipeline_mode = #tpu.pipeline_mode<synchronous>, transform_indices = @transform_3, window_bounds = array<i64: 48, 128>}, {pipeline_mode = #tpu.pipeline_mode<synchronous>, transform_indices = @transform_4, window_bounds = array<i64: 1, 128>}, {pipeline_mode = #tpu.pipeline_mode<synchronous>, transform_indices = @transform_5, window_bounds = array<i64: 64, 128>}, {pipeline_mode = #tpu.pipeline_mode<synchronous>, transform_indices = @transform_6, window_bounds = array<i64: 1, 128>}, {pipeline_mode = #tpu.pipeline_mode<synchronous>, transform_indices = @transform_7, window_bounds = array<i64: 32, 128>}, {pipeline_mode = #tpu.pipeline_mode<synchronous>, transform_indices = @transform_8, window_bounds = array<i64: 1, 128>}, {transform_indices = @transform_9, window_bounds = array<i64: 8, 128>}, {transform_indices = @transform_10, window_bounds = array<i64: 8, 128>}]} {
    %c0 = arith.constant 0 : index
    %c0_0 = arith.constant 0 : index
    %0 = vector.load %arg3[%c0, %c0_0] : memref<8x128xf32, #tpu.memory_space<vmem>>, vector<8x128xf32>
    %1 = vector.extract_strided_slice %0 {offsets = [0, 0], sizes = [8, 32], strides = [1, 1]} : vector<8x128xf32> to vector<8x32xf32>
    %2 = vector.extract_strided_slice %0 {offsets = [0, 32], sizes = [8, 32], strides = [1, 1]} : vector<8x128xf32> to vector<8x32xf32>
    %3 = vector.extract_strided_slice %0 {offsets = [0, 64], sizes = [8, 32], strides = [1, 1]} : vector<8x128xf32> to vector<8x32xf32>
    %4 = vector.extract_strided_slice %0 {offsets = [0, 96], sizes = [8, 32], strides = [1, 1]} : vector<8x128xf32> to vector<8x32xf32>
    %c0_1 = arith.constant 0 : index
    %c0_2 = arith.constant 0 : index
    %5 = vector.load %arg1[%c0_1, %c0_2] : memref<8x4xf32, #tpu.memory_space<vmem>>, vector<8x4xf32>
    %c0_3 = arith.constant 0 : index
    %c0_4 = arith.constant 0 : index
    %6 = vector.load %arg2[%c0_3, %c0_4] : memref<8x12xf32, #tpu.memory_space<vmem>>, vector<8x12xf32>
    %7 = tpu.concatenate %5, %6, %1 in 1 : vector<8x4xf32>, vector<8x12xf32>, vector<8x32xf32> -> vector<8x48xf32>
    %c0_5 = arith.constant 0 : index
    %c0_6 = arith.constant 0 : index
    %8 = vector.load %arg4[%c0_5, %c0_6] : memref<48x128xf32, #tpu.memory_space<vmem>>, vector<48x128xf32>
    %cst = arith.constant dense<0.000000e+00> : vector<8x128xf32>
    %9 = tpu.matmul %7, %8, %cst {dimension_numbers = #tpu.dot_dimension_numbers<[1], [0], [0], [1], [0, 0, 1, 1], [], []>} : vector<8x48xf32>, vector<48x128xf32>, vector<8x128xf32> -> vector<8x128xf32>
    %c0_7 = arith.constant 0 : index
    %c0_8 = arith.constant 0 : index
    %10 = vector.load %arg5[%c0_7, %c0_8] : memref<1x128xf32, #tpu.memory_space<vmem>>, vector<1x128xf32>
    %11 = vector.broadcast %10 : vector<1x128xf32> to vector<8x128xf32>
    %12 = arith.addf %9, %11 : vector<8x128xf32>
    %13 = vector.extract_strided_slice %12 {offsets = [0, 0], sizes = [8, 32], strides = [1, 1]} : vector<8x128xf32> to vector<8x32xf32>
    %14 = arith.negf %13 : vector<8x32xf32>
    %15 = math.exp %14 : vector<8x32xf32>
    %cst_9 = arith.constant 1.000000e+00 : f32
    %16 = vector.broadcast %cst_9 : f32 to vector<8x32xf32>
    %17 = arith.addf %16, %15 : vector<8x32xf32>
    %18 = arith.divf %16, %17 : vector<8x32xf32>
    %19 = vector.extract_strided_slice %12 {offsets = [0, 32], sizes = [8, 32], strides = [1, 1]} : vector<8x128xf32> to vector<8x32xf32>
    %20 = arith.negf %19 : vector<8x32xf32>
    %21 = math.exp %20 : vector<8x32xf32>
    %cst_10 = arith.constant 1.000000e+00 : f32
    %22 = vector.broadcast %cst_10 : f32 to vector<8x32xf32>
    %23 = arith.addf %22, %21 : vector<8x32xf32>
    %24 = arith.divf %22, %23 : vector<8x32xf32>
    %25 = vector.extract_strided_slice %12 {offsets = [0, 64], sizes = [8, 32], strides = [1, 1]} : vector<8x128xf32> to vector<8x32xf32>
    %26 = math.tanh %25 : vector<8x32xf32>
    %27 = vector.extract_strided_slice %12 {offsets = [0, 96], sizes = [8, 32], strides = [1, 1]} : vector<8x128xf32> to vector<8x32xf32>
    %28 = arith.negf %27 : vector<8x32xf32>
    %29 = math.exp %28 : vector<8x32xf32>
    %cst_11 = arith.constant 1.000000e+00 : f32
    %30 = vector.broadcast %cst_11 : f32 to vector<8x32xf32>
    %31 = arith.addf %30, %29 : vector<8x32xf32>
    %32 = arith.divf %30, %31 : vector<8x32xf32>
    %33 = arith.mulf %24, %2 : vector<8x32xf32>
    %34 = arith.mulf %18, %26 : vector<8x32xf32>
    %35 = arith.addf %33, %34 : vector<8x32xf32>
    %36 = math.tanh %35 : vector<8x32xf32>
    %37 = arith.mulf %32, %36 : vector<8x32xf32>
    %38 = tpu.concatenate %37, %3 in 1 : vector<8x32xf32>, vector<8x32xf32> -> vector<8x64xf32>
    %c0_12 = arith.constant 0 : index
    %c0_13 = arith.constant 0 : index
    %39 = vector.load %arg6[%c0_12, %c0_13] : memref<64x128xf32, #tpu.memory_space<vmem>>, vector<64x128xf32>
    %cst_14 = arith.constant dense<0.000000e+00> : vector<8x128xf32>
    %40 = tpu.matmul %38, %39, %cst_14 {dimension_numbers = #tpu.dot_dimension_numbers<[1], [0], [0], [1], [0, 0, 1, 1], [], []>} : vector<8x64xf32>, vector<64x128xf32>, vector<8x128xf32> -> vector<8x128xf32>
    %c0_15 = arith.constant 0 : index
    %c0_16 = arith.constant 0 : index
    %41 = vector.load %arg7[%c0_15, %c0_16] : memref<1x128xf32, #tpu.memory_space<vmem>>, vector<1x128xf32>
    %42 = vector.broadcast %41 : vector<1x128xf32> to vector<8x128xf32>
    %43 = arith.addf %40, %42 : vector<8x128xf32>
    %44 = vector.extract_strided_slice %43 {offsets = [0, 0], sizes = [8, 32], strides = [1, 1]} : vector<8x128xf32> to vector<8x32xf32>
    %45 = arith.negf %44 : vector<8x32xf32>
    %46 = math.exp %45 : vector<8x32xf32>
    %cst_17 = arith.constant 1.000000e+00 : f32
    %47 = vector.broadcast %cst_17 : f32 to vector<8x32xf32>
    %48 = arith.addf %47, %46 : vector<8x32xf32>
    %49 = arith.divf %47, %48 : vector<8x32xf32>
    %50 = vector.extract_strided_slice %43 {offsets = [0, 32], sizes = [8, 32], strides = [1, 1]} : vector<8x128xf32> to vector<8x32xf32>
    %51 = arith.negf %50 : vector<8x32xf32>
    %52 = math.exp %51 : vector<8x32xf32>
    %cst_18 = arith.constant 1.000000e+00 : f32
    %53 = vector.broadcast %cst_18 : f32 to vector<8x32xf32>
    %54 = arith.addf %53, %52 : vector<8x32xf32>
    %55 = arith.divf %53, %54 : vector<8x32xf32>
    %56 = vector.extract_strided_slice %43 {offsets = [0, 64], sizes = [8, 32], strides = [1, 1]} : vector<8x128xf32> to vector<8x32xf32>
    %57 = math.tanh %56 : vector<8x32xf32>
    %58 = vector.extract_strided_slice %43 {offsets = [0, 96], sizes = [8, 32], strides = [1, 1]} : vector<8x128xf32> to vector<8x32xf32>
    %59 = arith.negf %58 : vector<8x32xf32>
    %60 = math.exp %59 : vector<8x32xf32>
    %cst_19 = arith.constant 1.000000e+00 : f32
    %61 = vector.broadcast %cst_19 : f32 to vector<8x32xf32>
    %62 = arith.addf %61, %60 : vector<8x32xf32>
    %63 = arith.divf %61, %62 : vector<8x32xf32>
    %64 = arith.mulf %55, %4 : vector<8x32xf32>
    %65 = arith.mulf %49, %57 : vector<8x32xf32>
    %66 = arith.addf %64, %65 : vector<8x32xf32>
    %67 = math.tanh %66 : vector<8x32xf32>
    %68 = arith.mulf %63, %67 : vector<8x32xf32>
    %c0_20 = arith.constant 0 : index
    %c0_21 = arith.constant 0 : index
    %69 = vector.load %arg8[%c0_20, %c0_21] : memref<32x128xf32, #tpu.memory_space<vmem>>, vector<32x128xf32>
    %cst_22 = arith.constant dense<0.000000e+00> : vector<8x128xf32>
    %70 = tpu.matmul %68, %69, %cst_22 {dimension_numbers = #tpu.dot_dimension_numbers<[1], [0], [0], [1], [0, 0, 1, 1], [], []>} : vector<8x32xf32>, vector<32x128xf32>, vector<8x128xf32> -> vector<8x128xf32>
    %c0_23 = arith.constant 0 : index
    %c0_24 = arith.constant 0 : index
    %71 = vector.load %arg9[%c0_23, %c0_24] : memref<1x128xf32, #tpu.memory_space<vmem>>, vector<1x128xf32>
    %72 = vector.broadcast %71 : vector<1x128xf32> to vector<8x128xf32>
    %73 = arith.addf %70, %72 : vector<8x128xf32>
    %c0_25 = arith.constant 0 : index
    %c0_26 = arith.constant 0 : index
    %74 = vector.load %arg10[%c0_25, %c0_26] : memref<8x128xf32, #tpu.memory_space<vmem>>, vector<8x128xf32>
    tpu.vector_store %arg10[%c0_25, %c0_26], %73 {strides = array<i32>} : memref<8x128xf32, #tpu.memory_space<vmem>>, vector<8x128xf32>,
    %75 = tpu.concatenate %37, %35, %68, %66 in 1 : vector<8x32xf32>, vector<8x32xf32>, vector<8x32xf32>, vector<8x32xf32> -> vector<8x128xf32>
    %c0_27 = arith.constant 0 : index
    %c0_28 = arith.constant 0 : index
    %76 = vector.load %arg11[%c0_27, %c0_28] : memref<8x128xf32, #tpu.memory_space<vmem>>, vector<8x128xf32>
    tpu.vector_store %arg11[%c0_27, %c0_28], %75 {strides = array<i32>} : memref<8x128xf32, #tpu.memory_space<vmem>>, vector<8x128xf32>,
    return
  }
  func.func @transform_0(%arg0: i32) -> (i32, i32) {
    %c0_i32 = arith.constant 0 : i32
    %c0_i32_0 = arith.constant 0 : i32
    return %arg0, %c0_i32 : i32, i32
  }
  func.func @transform_1(%arg0: i32) -> (i32, i32) {
    %c0_i32 = arith.constant 0 : i32
    %c0_i32_0 = arith.constant 0 : i32
    return %arg0, %c0_i32 : i32, i32
  }
  func.func @transform_2(%arg0: i32) -> (i32, i32) {
    %c0_i32 = arith.constant 0 : i32
    %c0_i32_0 = arith.constant 0 : i32
    return %arg0, %c0_i32 : i32, i32
  }
  func.func @transform_3(%arg0: i32) -> (i32, i32) {
    %c0_i32 = arith.constant 0 : i32
    %c0_i32_0 = arith.constant 0 : i32
    %c0_i32_1 = arith.constant 0 : i32
    return %c0_i32, %c0_i32_0 : i32, i32
  }
  func.func @transform_4(%arg0: i32) -> (i32, i32) {
    %c0_i32 = arith.constant 0 : i32
    %c0_i32_0 = arith.constant 0 : i32
    %c0_i32_1 = arith.constant 0 : i32
    return %c0_i32, %c0_i32_0 : i32, i32
  }
  func.func @transform_5(%arg0: i32) -> (i32, i32) {
    %c0_i32 = arith.constant 0 : i32
    %c0_i32_0 = arith.constant 0 : i32
    %c0_i32_1 = arith.constant 0 : i32
    return %c0_i32, %c0_i32_0 : i32, i32
  }
  func.func @transform_6(%arg0: i32) -> (i32, i32) {
    %c0_i32 = arith.constant 0 : i32
    %c0_i32_0 = arith.constant 0 : i32
    %c0_i32_1 = arith.constant 0 : i32
    return %c0_i32, %c0_i32_0 : i32, i32
  }
  func.func @transform_7(%arg0: i32) -> (i32, i32) {
    %c0_i32 = arith.constant 0 : i32
    %c0_i32_0 = arith.constant 0 : i32
    %c0_i32_1 = arith.constant 0 : i32
    return %c0_i32, %c0_i32_0 : i32, i32
  }
  func.func @transform_8(%arg0: i32) -> (i32, i32) {
    %c0_i32 = arith.constant 0 : i32
    %c0_i32_0 = arith.constant 0 : i32
    %c0_i32_1 = arith.constant 0 : i32
    return %c0_i32, %c0_i32_0 : i32, i32
  }
  func.func @transform_9(%arg0: i32) -> (i32, i32) {
    %c0_i32 = arith.constant 0 : i32
    %c0_i32_0 = arith.constant 0 : i32
    return %arg0, %c0_i32 : i32, i32
  }
  func.func @transform_10(%arg0: i32) -> (i32, i32) {
    %c0_i32 = arith.constant 0 : i32
    %c0_i32_0 = arith.constant 0 : i32
    return %arg0, %c0_i32 : i32, i32
  }
}

</mosaic_0001>

<llo_original>
// kernel: tpu_custom_call.1
$region0: #{tpu_custom_call.1}
  #allocation0 [shape = 'u32[]', space=smem, size = 0x4, offset = 0x4, fixed_abs, tag = 'smem constant byte address 0x4 - core index']
  #allocation1 [shape = 'u32[72,128]{1,0:T(1,128)}', space=vmem, size = 0x9000, scoped, tag = 'internal scratch']
  %s0 = inlined_call_operand.vmem [shape: f32[8,4], index: 0, kind: input, shape index: {}]
  %s1 = inlined_call_operand.vmem [shape: f32[8,12], index: 1, kind: input, shape index: {}]
  %s2 = inlined_call_operand.hbm [shape: f32[8,128], index: 2, kind: input, shape index: {}]
  %s3 = inlined_call_operand.hbm [shape: f32[48,128], index: 3, kind: input, shape index: {}]
  %s4 = inlined_call_operand.vmem [shape: f32[1,128], index: 4, kind: input, shape index: {}]
  %s5 = inlined_call_operand.hbm [shape: f32[64,128], index: 5, kind: input, shape index: {}]
  %s6 = inlined_call_operand.vmem [shape: f32[1,128], index: 6, kind: input, shape index: {}]
  %s7 = inlined_call_operand.hbm [shape: f32[32,128], index: 7, kind: input, shape index: {}]
  %s8 = inlined_call_operand.vmem [shape: f32[1,128], index: 8, kind: input, shape index: {}]
  %s9 = inlined_call_operand.hbm [shape: f32[8,128], index: 9, kind: output, shape index: {0}]
  %s10 = inlined_call_operand.hbm [shape: f32[8,128], index: 10, kind: output, shape index: {1}]
  %11 = xla_tuple %s9, %s10
  %s12 = sld [smem:[#allocation0]]
  $region70: #{tpu_custom_call.1} parent=0
    _
  %s14 = ssub.s32 1, %s12
  %s15 = scalar_select 0, %s14, %s12
  $region1: #{tpu_custom_call.1} parent=0
    #allocation2 [shape = 'u8[4096]{0}', space=vmem, size = 0x1000, scoped, tag = 'input window, operand 2, single buffered']
    #allocation3 [shape = 's32[1]{0}', space=sflag, size = 0x4, scoped, tag = 'scoped memory for tpu_custom_call.1']
    #allocation4 [shape = 's32[1]{0}', space=sflag, size = 0x4, scoped, tag = 'scoped memory for tpu_custom_call.1']
    #allocation5 [shape = 'u8[24576]{0}', space=vmem, size = 0x6000, scoped, tag = 'input window, operand 3, single buffered']
    #allocation6 [shape = 's32[1]{0}', space=sflag, size = 0x4, scoped, tag = 'scoped memory for tpu_custom_call.1']
    #allocation7 [shape = 'u8[32768]{0}', space=vmem, size = 0x8000, scoped, tag = 'input window, operand 5, single buffered']
    #allocation8 [shape = 'u8[16384]{0}', space=vmem, size = 0x4000, scoped, tag = 'input window, operand 7, single buffered']
    #allocation9 [shape = 's32[1]{0}', space=sflag, size = 0x4, scoped, tag = 'scoped memory for tpu_custom_call.1']
    #allocation10 [shape = 'u8[4096]{0}', space=vmem, size = 0x1000, scoped, tag = 'output window, operand 0, single buffered']
    #allocation11 [shape = 'u8[4096]{0}', space=vmem, size = 0x1000, scoped, tag = 'output window, operand 1, single buffered']
    #allocation12 [shape = 's32[1]{0}', space=sflag, size = 0x4, scoped, tag = 'scoped memory for tpu_custom_call.1']
    %16 = vsyncpa [#allocation3], 0
    %17 = vsyncpa [#allocation6], 0
    %18 = vsyncpa [#allocation9], 0
    %19 = vsyncpa [#allocation4], 0
    %20 = vsyncpa [#allocation12], 0
    // Predicated region
    $region2: #{tpu_custom_call.1} parent=1 // pred_check
      _
    $region3: #{tpu_custom_call.1} parent=1 // pred_check_branch
      %22 = sbr.rel (0) target = $region5
    $region4: #{tpu_custom_call.1} parent=1 // pred_region
      _
    $region5: #{tpu_custom_call.1} parent=1 // pred_fallthru
      _
    // Predicated region
    $region6: #{tpu_custom_call.1} parent=1 // pred_check
      _
    $region7: #{tpu_custom_call.1} parent=1 // pred_check_branch
      %24 = sbr.rel (0) target = $region9
    $region8: #{tpu_custom_call.1} parent=1 // pred_region
      _
    $region9: #{tpu_custom_call.1} parent=1 // pred_fallthru
      _
    // Predicated region
    $region10: #{tpu_custom_call.1} parent=1 // pred_check
      _
    $region11: #{tpu_custom_call.1} parent=1 // pred_check_branch
      %26 = sbr.rel (0) target = $region13
    $region12: #{tpu_custom_call.1} parent=1 // pred_region
      %28 = vsyncadd [#allocation3], 0
      %s30 = sshll.u32 %s2, 4
      %s31 = int_to_ptr.hbm [resolvable:$true] %s30
      %s32 = sshll.u32 [#allocation2], 4
      %s33 = int_to_ptr.vmem [resolvable:$true] %s32
      %35 = dma.hbm_to_vmem [thread:$0]  %s31, 128, %s33, [#allocation3]
    $region13: #{tpu_custom_call.1} parent=1 // pred_fallthru
      _
    // Predicated region
    $region14: #{tpu_custom_call.1} parent=1 // pred_check
      _
    $region15: #{tpu_custom_call.1} parent=1 // pred_check_branch
      %37 = sbr.rel (0) target = $region17
    $region16: #{tpu_custom_call.1} parent=1 // pred_region
      %39 = vsyncadd [#allocation6], 0
      %s40 = sshll.u32 %s3, 4
      %s41 = int_to_ptr.hbm [resolvable:$true] %s40
      %s42 = sshll.u32 [#allocation5], 4
      %s43 = int_to_ptr.vmem [resolvable:$true] %s42
      %48 = dma.hbm_to_vmem [thread:$0]  %s41, 768, %s43, [#allocation6], 128, 128, 8
    $region17: #{tpu_custom_call.1} parent=1 // pred_fallthru
      _
    // Predicated region
    $region18: #{tpu_custom_call.1} parent=1 // pred_check
      _
    $region19: #{tpu_custom_call.1} parent=1 // pred_check_branch
      %50 = sbr.rel (0) target = $region21
    $region20: #{tpu_custom_call.1} parent=1 // pred_region
      _
    $region21: #{tpu_custom_call.1} parent=1 // pred_fallthru
      _
    // Predicated region
    $region22: #{tpu_custom_call.1} parent=1 // pred_check
      _
    $region23: #{tpu_custom_call.1} parent=1 // pred_check_branch
      %52 = sbr.rel (0) target = $region25
    $region24: #{tpu_custom_call.1} parent=1 // pred_region
      %54 = vsyncadd [#allocation6], 0
      %s55 = sshll.u32 %s5, 4
      %s56 = int_to_ptr.hbm [resolvable:$true] %s55
      %s57 = sshll.u32 [#allocation7], 4
      %s58 = int_to_ptr.vmem [resolvable:$true] %s57
      %63 = dma.hbm_to_vmem [thread:$0]  %s56, 1024, %s58, [#allocation6], 128, 128, 8
    $region25: #{tpu_custom_call.1} parent=1 // pred_fallthru
      _
    // Predicated region
    $region26: #{tpu_custom_call.1} parent=1 // pred_check
      _
    $region27: #{tpu_custom_call.1} parent=1 // pred_check_branch
      %65 = sbr.rel (0) target = $region29
    $region28: #{tpu_custom_call.1} parent=1 // pred_region
      _
    $region29: #{tpu_custom_call.1} parent=1 // pred_fallthru
      _
    // Predicated region
    $region30: #{tpu_custom_call.1} parent=1 // pred_check
      _
    $region31: #{tpu_custom_call.1} parent=1 // pred_check_branch
      %67 = sbr.rel (0) target = $region33
    $region32: #{tpu_custom_call.1} parent=1 // pred_region
      %69 = vsyncadd [#allocation9], 0
      %s70 = sshll.u32 %s7, 4
      %s71 = int_to_ptr.hbm [resolvable:$true] %s70
      %s72 = sshll.u32 [#allocation8], 4
      %s73 = int_to_ptr.vmem [resolvable:$true] %s72
      %78 = dma.hbm_to_vmem [thread:$0]  %s71, 512, %s73, [#allocation9], 128, 128, 8
    $region33: #{tpu_custom_call.1} parent=1 // pred_fallthru
      _
    // Predicated region
    $region34: #{tpu_custom_call.1} parent=1 // pred_check
      _
    $region35: #{tpu_custom_call.1} parent=1 // pred_check_branch
      %80 = sbr.rel (0) target = $region37
    $region36: #{tpu_custom_call.1} parent=1 // pred_region
      _
    $region37: #{tpu_custom_call.1} parent=1 // pred_fallthru
      _
    // Predicated region
    $region38: #{tpu_custom_call.1} parent=1 // pred_check
      _
    $region39: #{tpu_custom_call.1} parent=1 // pred_check_branch
      %82 = sbr.rel (0) target = $region41
    $region40: #{tpu_custom_call.1} parent=1 // pred_region
      %84 = dma.done [#allocation3], 128
    $region41: #{tpu_custom_call.1} parent=1 // pred_fallthru
      _
    // Predicated region
    $region42: #{tpu_custom_call.1} parent=1 // pred_check
      _
    $region43: #{tpu_custom_call.1} parent=1 // pred_check_branch
      %86 = sbr.rel (0) target = $region45
    $region44: #{tpu_custom_call.1} parent=1 // pred_region
      %88 = dma.done [#allocation6], 768
    $region45: #{tpu_custom_call.1} parent=1 // pred_fallthru
      _
    // Predicated region
    $region46: #{tpu_custom_call.1} parent=1 // pred_check
      _
    $region47: #{tpu_custom_call.1} parent=1 // pred_check_branch
      %90 = sbr.rel (0) target = $region49
    $region48: #{tpu_custom_call.1} parent=1 // pred_region
      %92 = dma.done [#allocation6], 1024
    $region49: #{tpu_custom_call.1} parent=1 // pred_fallthru
      _
    // Predicated region
    $region50: #{tpu_custom_call.1} parent=1 // pred_check
      _
    $region51: #{tpu_custom_call.1} parent=1 // pred_check_branch
      %94 = sbr.rel (0) target = $region53
    $region52: #{tpu_custom_call.1} parent=1 // pred_region
      %96 = dma.done [#allocation9], 512
    $region53: #{tpu_custom_call.1} parent=1 // pred_fallthru
      _
    %v97 = vld [vmem:[#allocation2] sm:$0xff]
    %v98 = vld [vmem:[%s0] sm:$0xff]
    %v99 = vld [vmem:[%s1] sm:$0xff]
    %101 = vrot.lane.b32.xlu0 %v99, 4
    %v102 = vpop.permute.xlu0 %101
    %105 = vrot.lane.b32.xlu0 %v97, 16
    %v106 = vpop.permute.xlu0 %105
    %vm108 = vcmask 31744
    %v109 = vsel %vm108, %v98, %v102
    %vm110 = vcmask 130048
    %v111 = vsel %vm110, %v109, %v106
    %v112 = vld [vmem:[#allocation5] sm:$0xff]
    %v113 = vld [vmem:[#allocation5 + $0x8] sm:$0xff]
    %v114 = vld [vmem:[#allocation5 + $0x10] sm:$0xff]
    %v115 = vld [vmem:[#allocation5 + $0x18] sm:$0xff]
    %v116 = vld [vmem:[#allocation5 + $0x20] sm:$0xff]
    %v117 = vld [vmem:[#allocation5 + $0x28] sm:$0xff]
    %v118 = vld [vmem:[%s4] sm:$0x1]
    %v120 = vperm.slane %v118, 0
    %vm122 = vcmask 392192
    %v124 = vsel %vm122, %v111, 0
    %126 = vmatpush.msra.mxu0 0.0
    %127 = vmatpush.msra.mxu0 0.0
    %128 = vmatpush.msra.mxu0 0.0
    %129 = vmatpush.msra.mxu0 0.0
    %130 = vmatpush.msra.mxu0 0.0
    %131 = vmatpush.msra.mxu0 0.0
    %132 = vmatpush.msra.mxu0 0.0
    %133 = vmatpush.msra.mxu0 0.0
    %134 = vmatpush.msra.mxu0 0.0
    %135 = vmatpush.msra.mxu0 0.0
    %136 = vmatpush.msra.mxu0 %v117
    %137 = vmatpush.msra.mxu0 %v116
    %138 = vmatpush.msra.mxu0 %v115
    %139 = vmatpush.msra.mxu0 %v114
    %140 = vmatpush.msra.mxu0 %v113
    %141 = vmatpush.msra.mxu0 %v112
    %142 = vmatmul.f32.gmra.mxu0 %v124
    %v143 = vpop.f32.mrf.mxu0
    %v144 = vadd.f32 %v120, %v143
    %145 = vdwg.mxu0
    %v146 = vxor.u32 %v144, 2147483648
    %v147 = vmul.f32 %v146, 1.442695
    %v148 = vpow.pop %v147
    %v149 = vadd.f32 %v148, 1.0
    %v150 = vrcp.pop %v149
    %v151 = vmul.f32 %v149, %v150
    %v152 = vsub.f32 1.0, %v151
    %v153 = vmul.f32 %v150, %v152
    %v154 = vadd.f32 %v150, %v153
    %vm155 = vweird.f32 %v149
    %vm156 = vweird.f32 %v150
    %vm157 = vmor %vm155, %vm156
    %v158 = vsel %vm157, %v150, %v154
    %v159 = vand.u32 2147483647, %v149
    %vm160 = vcmp.eq.f32.partialorder %v159, 8.507059e+37
    %v161 = vand.u32 %v149, 2147483648
    %v162 = vor.u32 1.1754944e-38, %v161
    %v163 = vsel %vm160, %v162, %v158
    %v164 = vmul.f32 1.0, %v163
    %v165 = vtanh.pop %v144
    %v166 = vmul.f32 %v164, %v97
    %168 = vrot.lane.b32.xlu0 %v165, 64
    %v169 = vpop.permute.xlu0 %168
    %v171 = vmul.f32 %v164, %v169
    %173 = vrot.lane.b32.xlu0 %v171, 32
    %v174 = vpop.permute.xlu0 %173
    %v176 = vadd.f32 %v166, %v174
    %v177 = vtanh.pop %v176
    %179 = vrot.lane.b32.xlu0 %v177, 64
    %v180 = vpop.permute.xlu0 %179
    %v182 = vmul.f32 %v164, %v180
    %184 = vrot.lane.b32.xlu0 %v182, 32
    %v185 = vpop.permute.xlu0 %184
    %187 = vrot.lane.b32.xlu0 %v97, 96
    %v188 = vpop.permute.xlu0 %187
    %vm190 = vcmask 261120
    %v191 = vsel %vm190, %v185, %v188
    %v192 = vld [vmem:[#allocation7] sm:$0xff]
    %v193 = vld [vmem:[#allocation7 + $0x8] sm:$0xff]
    %v194 = vld [vmem:[#allocation7 + $0x10] sm:$0xff]
    %v195 = vld [vmem:[#allocation7 + $0x18] sm:$0xff]
    %v196 = vld [vmem:[#allocation7 + $0x20] sm:$0xff]
    %v197 = vld [vmem:[#allocation7 + $0x28] sm:$0xff]
    %v198 = vld [vmem:[#allocation7 + $0x30] sm:$0xff]
    %v199 = vld [vmem:[#allocation7 + $0x38] sm:$0xff]
    %v200 = vld [vmem:[%s6] sm:$0x1]
    %v202 = vperm.slane %v200, 0
    %vm204 = vcmask 523264
    %v206 = vsel %vm204, %v191, 0
    %208 = vmatpush.msra.mxu0 0.0
    %209 = vmatpush.msra.mxu0 0.0
    %210 = vmatpush.msra.mxu0 0.0
    %211 = vmatpush.msra.mxu0 0.0
    %212 = vmatpush.msra.mxu0 0.0
    %213 = vmatpush.msra.mxu0 0.0
    %214 = vmatpush.msra.mxu0 0.0
    %215 = vmatpush.msra.mxu0 0.0
    %216 = vmatpush.msra.mxu0 %v199
    %217 = vmatpush.msra.mxu0 %v198
    %218 = vmatpush.msra.mxu0 %v197
    %219 = vmatpush.msra.mxu0 %v196
    %220 = vmatpush.msra.mxu0 %v195
    %221 = vmatpush.msra.mxu0 %v194
    %222 = vmatpush.msra.mxu0 %v193
    %223 = vmatpush.msra.mxu0 %v192
    %224 = vmatmul.f32.gmra.mxu0 %v206
    %v225 = vpop.f32.mrf.mxu0
    %v226 = vadd.f32 %v202, %v225
    %227 = vdwg.mxu0
    %v228 = vxor.u32 %v226, 2147483648
    %v229 = vmul.f32 %v228, 1.442695
    %v230 = vpow.pop %v229
    %v231 = vadd.f32 %v230, 1.0
    %v232 = vrcp.pop %v231
    %v233 = vmul.f32 %v231, %v232
    %v234 = vsub.f32 1.0, %v233
    %v235 = vmul.f32 %v232, %v234
    %v236 = vadd.f32 %v232, %v235
    %vm237 = vweird.f32 %v231
    %vm238 = vweird.f32 %v232
    %vm239 = vmor %vm237, %vm238
    %v240 = vsel %vm239, %v232, %v236
    %v241 = vand.u32 2147483647, %v231
    %vm242 = vcmp.eq.f32.partialorder %v241, 8.507059e+37
    %v243 = vand.u32 %v231, 2147483648
    %v244 = vor.u32 1.1754944e-38, %v243
    %v245 = vsel %vm242, %v244, %v240
    %v246 = vmul.f32 1.0, %v245
    %v247 = vtanh.pop %v226
    %248 = vrot.lane.b32.xlu0 %v97, 64
    %v249 = vpop.permute.xlu0 %248
    %v251 = vmul.f32 %v246, %v249
    %253 = vrot.lane.b32.xlu0 %v247, 64
    %v254 = vpop.permute.xlu0 %253
    %v256 = vmul.f32 %v246, %v254
    %258 = vrot.lane.b32.xlu0 %v256, 32
    %v259 = vpop.permute.xlu0 %258
    %v261 = vadd.f32 %v251, %v259
    %v262 = vtanh.pop %v261
    %264 = vrot.lane.b32.xlu0 %v262, 64
    %v265 = vpop.permute.xlu0 %264
    %v267 = vmul.f32 %v246, %v265
    %v268 = vld [vmem:[#allocation8] sm:$0xff]
    %v269 = vld [vmem:[#allocation8 + $0x8] sm:$0xff]
    %v270 = vld [vmem:[#allocation8 + $0x10] sm:$0xff]
    %v271 = vld [vmem:[#allocation8 + $0x18] sm:$0xff]
    %v272 = vld [vmem:[%s8] sm:$0x1]
    %v274 = vperm.slane %v272, 0
    %277 = vrot.lane.b32.xlu0 %v267, 32
    %v278 = vpop.permute.xlu0 %277
    %v279 = vsel %vm190, %v278, 0
    %281 = vmatpush.msra.mxu0 0.0
    %282 = vmatpush.msra.mxu0 0.0
    %283 = vmatpush.msra.mxu0 0.0
    %284 = vmatpush.msra.mxu0 0.0
    %285 = vmatpush.msra.mxu0 0.0
    %286 = vmatpush.msra.mxu0 0.0
    %287 = vmatpush.msra.mxu0 0.0
    %288 = vmatpush.msra.mxu0 0.0
    %289 = vmatpush.msra.mxu0 0.0
    %290 = vmatpush.msra.mxu0 0.0
    %291 = vmatpush.msra.mxu0 0.0
    %292 = vmatpush.msra.mxu0 0.0
    %293 = vmatpush.msra.mxu0 %v271
    %294 = vmatpush.msra.mxu0 %v270
    %295 = vmatpush.msra.mxu0 %v269
    %296 = vmatpush.msra.mxu0 %v268
    %297 = vmatmul.f32.gmra.mxu0 %v279
    %v298 = vpop.f32.mrf.mxu0
    %v299 = vadd.f32 %v274, %v298
    %300 = vdwg.mxu0
    %301 = vst [vmem:[#allocation10] sm:$0xff] %v299
    %302 = vrot.lane.b32.xlu0 %v267, 96
    %v303 = vpop.permute.xlu0 %302
    %306 = vrot.lane.b32.xlu0 %v261, 64
    %v307 = vpop.permute.xlu0 %306
    %v309 = vsel %vm190, %v185, %v176
    %v310 = vsel %vm204, %v309, %v303
    %vm311 = vcmask 785408
    %v312 = vsel %vm311, %v310, %v307
    %313 = vst [vmem:[#allocation11] sm:$0xff] %v312
    // Predicated region
    $region54: #{tpu_custom_call.1} parent=1 // pred_check
      _
    $region55: #{tpu_custom_call.1} parent=1 // pred_check_branch
      %315 = sbr.rel (0) target = $region57
    $region56: #{tpu_custom_call.1} parent=1 // pred_region
      %317 = vsyncadd [#allocation4], 0
      %s319 = sshll.u32 [#allocation10], 4
      %s320 = int_to_ptr.vmem [resolvable:$true] %s319
      %s321 = sshll.u32 %s9, 4
      %s322 = int_to_ptr.hbm [resolvable:$true] %s321
      %324 = dma.vmem_to_hbm [thread:$0]  %s320, 128, %s322, [#allocation4]
    $region57: #{tpu_custom_call.1} parent=1 // pred_fallthru
      _
    // Predicated region
    $region58: #{tpu_custom_call.1} parent=1 // pred_check
      _
    $region59: #{tpu_custom_call.1} parent=1 // pred_check_branch
      %326 = sbr.rel (0) target = $region61
    $region60: #{tpu_custom_call.1} parent=1 // pred_region
      %328 = vsyncadd [#allocation12], 0
      %s330 = sshll.u32 [#allocation11], 4
      %s331 = int_to_ptr.vmem [resolvable:$true] %s330
      %s332 = sshll.u32 %s10, 4
      %s333 = int_to_ptr.hbm [resolvable:$true] %s332
      %335 = dma.vmem_to_hbm [thread:$0]  %s331, 128, %s333, [#allocation12]
    $region61: #{tpu_custom_call.1} parent=1 // pred_fallthru
      _
    // Predicated region
    $region62: #{tpu_custom_call.1} parent=1 // pred_check
      _
    $region63: #{tpu_custom_call.1} parent=1 // pred_check_branch
      %337 = sbr.rel (0) target = $region65
    $region64: #{tpu_custom_call.1} parent=1 // pred_region
      %339 = dma.done [#allocation4], 128
    $region65: #{tpu_custom_call.1} parent=1 // pred_fallthru
      _
    // Predicated region
    $region66: #{tpu_custom_call.1} parent=1 // pred_check
      _
    $region67: #{tpu_custom_call.1} parent=1 // pred_check_branch
      %341 = sbr.rel (0) target = $region69
    $region68: #{tpu_custom_call.1} parent=1 // pred_region
      %343 = dma.done [#allocation12], 128
    $region69: #{tpu_custom_call.1} parent=1 // pred_fallthru
      _
    %344 = vsyncpa [#allocation3], 1
    %345 = vsyncpa [#allocation6], 1
    %346 = vsyncpa [#allocation9], 1
    %347 = vsyncpa [#allocation4], 1
    %348 = vsyncpa [#allocation12], 1

</llo_original>
